<compile_context>
chip_gen: v5e
topology: v5e:2x2
jax: 0.10.0
libtpu: 0.0.40
codegen_flags: <defaults>
</compile_context>

<pallas_src>
import functools

import jax
import jax.numpy as jnp
from jax import lax
from jax.experimental import pallas as pl
from jax.experimental.pallas import tpu as pltpu


# ---------------------------------------------------------------------------
# Tiling helpers (respect the (8, 128) last-two-dims block rule).
# ---------------------------------------------------------------------------
def _pick_sublane_tile(dim, preferred):
    """Tile for a second-to-last block dim: multiple of 8, or the full dim."""
    if dim <= preferred:
        return dim
    for t in (preferred, 256, 128, 64, 32, 16, 8):
        if t <= preferred and dim % t == 0:
            return t
    return dim


def _pick_lane_tile(dim, preferred):
    """Tile for a last (lane) block dim: multiple of 128, or the full dim."""
    if dim <= preferred:
        return dim
    for t in (preferred, 512, 256, 128):
        if t <= preferred and dim % t == 0:
            return t
    return dim


# ---------------------------------------------------------------------------
# Kernel 1: tiled GEMM  y = x @ W (+ b), bf16 MXU inputs, f32 accumulation.
# ---------------------------------------------------------------------------
def _matmul_kernel(x_ref, w_ref, o_ref, acc_ref):
    @pl.when(pl.program_id(2) == 0)
    def _():
        acc_ref[...] = jnp.zeros_like(acc_ref)

    acc_ref[...] += jnp.dot(x_ref[...], w_ref[...],
                            preferred_element_type=jnp.float32)

    @pl.when(pl.program_id(2) == pl.num_programs(2) - 1)
    def _():
        o_ref[...] = acc_ref[...].astype(o_ref.dtype)


def _matmul_bias_kernel(x_ref, w_ref, b_ref, o_ref, acc_ref):
    @pl.when(pl.program_id(2) == 0)
    def _():
        acc_ref[...] = jnp.zeros_like(acc_ref)

    acc_ref[...] += jnp.dot(x_ref[...], w_ref[...],
                            preferred_element_type=jnp.float32)

    @pl.when(pl.program_id(2) == pl.num_programs(2) - 1)
    def _():
        # Bias add + cast happen once per (i, j) tile, outside the k loop.
        o_ref[...] = (acc_ref[...] + b_ref[...].astype(jnp.float32)
                      ).astype(o_ref.dtype)


def linear(x2d, w, b=None, *, out_dtype=None, tm=256, tn=256, tk=512):
    """x2d: (M, K), w: (K, Nout), b: (Nout,) or None -> (M, Nout)."""
    M, K = x2d.shape
    K2, Nout = w.shape
    assert K == K2
    out_dtype = out_dtype or x2d.dtype

    tm = _pick_sublane_tile(M, tm)
    tn = _pick_lane_tile(Nout, tn)
    tk = _pick_lane_tile(K, tk)
    grid = (M // tm, Nout // tn, K // tk)

    in_specs = [
        pl.BlockSpec((tm, tk), lambda i, j, k: (i, k)),
        pl.BlockSpec((tk, tn), lambda i, j, k: (k, j)),
    ]
    args = [x2d, w]
    if b is None:
        kernel = _matmul_kernel
    else:
        kernel = _matmul_bias_kernel
        in_specs.append(pl.BlockSpec((1, tn), lambda i, j, k: (0, j)))
        args.append(b.reshape(1, Nout))

    return pl.pallas_call(
        kernel,
        out_shape=jax.ShapeDtypeStruct((M, Nout), out_dtype),
        grid=grid,
        in_specs=in_specs,
        out_specs=pl.BlockSpec((tm, tn), lambda i, j, k: (i, j)),
        scratch_shapes=[pltpu.VMEM((tm, tn), jnp.float32)],
        compiler_params=pltpu.CompilerParams(
            dimension_semantics=("parallel", "parallel", "arbitrary")),
    )(*args)


# ---------------------------------------------------------------------------
# Kernel 2: flash-style attention (online softmax over KV tiles) per (b, head)
# ---------------------------------------------------------------------------
def _flash_attn_kernel(q_ref, k_ref, v_ref, o_ref, m_sc, l_sc, acc_sc, *, scale):
    ki = pl.program_id(2)

    @pl.when(ki == 0)
    def _():
        m_sc[...] = jnp.full_like(m_sc, -jnp.inf)
        l_sc[...] = jnp.zeros_like(l_sc)
        acc_sc[...] = jnp.zeros_like(acc_sc)

    q = q_ref[0]                                   # (tq, hd)  bf16
    k = k_ref[0]                                   # (tkv, hd) bf16
    v = v_ref[0]                                   # (tkv, hd) bf16

    # Scores: contract head dim directly (no explicit k transpose); f32 acc.
    s = lax.dot_general(q, k, (((1,), (1,)), ((), ())),
                        preferred_element_type=jnp.float32) * scale   # (tq, tkv)

    m_prev = m_sc[...]
    m_new = jnp.maximum(m_prev, jnp.max(s, axis=-1, keepdims=True))
    alpha = jnp.exp(m_prev - m_new)
    p = jnp.exp(s - m_new)                                            # f32
    l_sc[...] = alpha * l_sc[...] + jnp.sum(p, axis=-1, keepdims=True)
    pv = lax.dot_general(p.astype(v.dtype), v, (((1,), (0,)), ((), ())),
                         preferred_element_type=jnp.float32)          # (tq, hd)
    acc_sc[...] = alpha * acc_sc[...] + pv
    m_sc[...] = m_new

    @pl.when(ki == pl.num_programs(2) - 1)
    def _():
        inv_l = pl.reciprocal(l_sc[...], approx=True)
        o_ref[0] = (acc_sc[...] * inv_l).astype(o_ref.dtype)


def mha_flash(qkv_heads, num_bh, scale, *, tq=256, tkv=256):
    """qkv_heads: (3*B*H, N, hd), rows [0,BH)=q, [BH,2BH)=k, [2BH,3BH)=v."""
    _, N, hd = qkv_heads.shape
    tq = _pick_sublane_tile(N, tq)
    tkv = _pick_sublane_tile(N, tkv)
    grid = (num_bh, N // tq, N // tkv)

    kern = functools.partial(_flash_attn_kernel, scale=scale)
    return pl.pallas_call(
        kern,
        out_shape=jax.ShapeDtypeStruct((num_bh, N, hd), qkv_heads.dtype),
        grid=grid,
        in_specs=[
            pl.BlockSpec((1, tq, hd), lambda bh, qi, ki: (bh, qi, 0)),
            pl.BlockSpec((1, tkv, hd), lambda bh, qi, ki: (num_bh + bh, ki, 0)),
            pl.BlockSpec((1, tkv, hd), lambda bh, qi, ki: (2 * num_bh + bh, ki, 0)),
        ],
        out_specs=pl.BlockSpec((1, tq, hd), lambda bh, qi, ki: (bh, qi, 0)),
        scratch_shapes=[
            pltpu.VMEM((tq, 1), jnp.float32),    # running max
            pltpu.VMEM((tq, 1), jnp.float32),    # running denominator
            pltpu.VMEM((tq, hd), jnp.float32),   # running numerator
        ],
        compiler_params=pltpu.CompilerParams(
            dimension_semantics=("parallel", "parallel", "arbitrary")),
    )(qkv_heads, qkv_heads, qkv_heads)


# ---------------------------------------------------------------------------
# Attention module (forward only)
# ---------------------------------------------------------------------------
class Attention:
    def __init__(self, dim, num_heads=8, qkv_bias=False, key=None,
                 compute_dtype=jnp.bfloat16):
        assert dim % num_heads == 0, "dim should be divisible by num_heads"
        self.dim = dim
        self.num_heads = num_heads
        self.head_dim = dim // num_heads
        self.scale = self.head_dim ** (-0.5)
        self.compute_dtype = compute_dtype

        k1, k2, k3 = jax.random.split(key, 3)
        # PyTorch Linear stores (out, in); keep (in, out) so forward is x @ W.
        self.w_qkv = jax.random.normal(k1, (dim, 3 * dim), jnp.float32) * 0.02
        self.b_qkv = jnp.zeros((3 * dim,), jnp.float32) if qkv_bias else None
        self.w_proj = jax.random.normal(k2, (dim, dim), jnp.float32) * 0.02
        self.b_proj = jax.random.normal(k3, (dim,), jnp.float32) * 0.02
        # bf16 compute copies for the MXU (accumulation is f32 in-kernel).
        self.w_qkv_c = self.w_qkv.astype(compute_dtype)
        self.w_proj_c = self.w_proj.astype(compute_dtype)
        # TODO(synk): attn_drop / proj_drop are identity (p=0.0 / eval mode);
        # TpLinear is treated as a plain Linear (single device, no TP comm).

    def __call__(self, x):
        B, N, D = x.shape
        H, hd = self.num_heads, self.head_dim
        cd = self.compute_dtype

        # QKV projection (tiled Pallas GEMM; no bias when qkv_bias=False).
        x2d = x.reshape(B * N, D).astype(cd)
        qkv = linear(x2d, self.w_qkv_c, self.b_qkv, out_dtype=cd)   # (B*N, 3D)

        # Head split: a single XLA transpose (B,N,3,H,hd) -> (3,B,H,N,hd).
        # TODO(synk): folding this (and the merge below) into BlockSpec index
        # maps would need per-head lane slices of the packed qkv buffer, which
        # violate the (8,128) last-two-dims block rule for head_dim < 128.
        qkv_t = (qkv.reshape(B, N, 3, H, hd)
                 .transpose(2, 0, 3, 1, 4)
                 .reshape(3 * B * H, N, hd))

        # Flash attention over (batch*heads, q-tiles, kv-tiles).
        oh = mha_flash(qkv_t, B * H, self.scale)                    # (B*H, N, hd)

        # Merge heads, then output projection (tiled Pallas GEMM + bias).
        y = (oh.reshape(B, H, N, hd)
             .transpose(0, 2, 1, 3)
             .reshape(B * N, D))
        out = linear(y, self.w_proj_c, self.b_proj, out_dtype=jnp.float32)
        return out.reshape(B, N, D)


# ---------------------------------------------------------------------------
# Pure-JAX (f32) reference for sanity checking
# ---------------------------------------------------------------------------
def reference(x, m: Attention):
    B, N, D = x.shape
    H, hd = m.num_heads, m.head_dim
    qkv = x @ m.w_qkv
    if m.b_qkv is not None:
        qkv = qkv + m.b_qkv
    q, k, v = jnp.split(qkv, 3, axis=-1)
    sh = lambda t: t.reshape(B, N, H, hd).transpose(0, 2, 1, 3)
    q, k, v = sh(q), sh(k), sh(v)
    attn = jax.nn.softmax((q * m.scale) @ k.transpose(0, 1, 3, 2), axis=-1)
    y = (attn @ v).transpose(0, 2, 1, 3).reshape(B, N, D)
    return y @ m.w_proj + m.b_proj


if __name__ == "__main__":
    key = jax.random.PRNGKey(0)
    k_param, k_x = jax.random.split(key)

    B, N, DIM, HEADS = 2, 8, 32, 4        # head_dim = 8
    mod = Attention(DIM, num_heads=HEADS, qkv_bias=False, key=k_param)
    x = jax.random.normal(k_x, (B, N, DIM), jnp.float32)

    out = jax.block_until_ready(mod(x))
    ref = reference(x, mod)

    assert out.shape == (B, N, DIM)
    err = float(jnp.max(jnp.abs(out - ref)))
    # bf16 MXU inputs + approx reciprocal vs. an f32 reference.
    assert err < 1e-2, err
    print("KERNEL_OK")
</pallas_src>

<mosaic_0001>
module attributes {stable_mosaic.version = 11 : i64} {
  func.func @_matmul_kernel(%arg0: i32, %arg1: i32, %arg2: i32, %arg3: memref<16x32xbf16, #tpu.memory_space<vmem>>, %arg4: memref<32x96xbf16, #tpu.memory_space<vmem>>, %arg5: memref<16x96xbf16, #tpu.memory_space<vmem>>, %arg6: memref<16x96xf32, #tpu.memory_space<vmem>>) attributes {dimension_semantics = [#tpu.dimension_semantics<parallel>, #tpu.dimension_semantics<parallel>, #tpu.dimension_semantics<arbitrary>], iteration_bounds = array<i64: 1, 1, 1>, scalar_prefetch = 0 : i64, scratch_operands = 1 : i64, tpu.core_type = #tpu.core_type<tc>, window_params = [{transform_indices = @transform_0, window_bounds = array<i64: 16, 32>}, {transform_indices = @transform_1, window_bounds = array<i64: 32, 96>}, {transform_indices = @transform_2, window_bounds = array<i64: 16, 96>}]} {
    %c0_i32 = arith.constant 0 : i32
    %0 = arith.cmpi eq, %arg2, %c0_i32 : i32
    %1 = arith.extui %0 : i1 to i32
    %c0_i32_0 = arith.constant 0 : i32
    %2 = arith.cmpi ne, %1, %c0_i32_0 : i32
    scf.if %2 {
      %cst_10 = arith.constant 0.000000e+00 : f32
      %12 = vector.broadcast %cst_10 : f32 to vector<16x96xf32>
      %c0_11 = arith.constant 0 : index
      %c0_12 = arith.constant 0 : index
      %13 = vector.load %arg6[%c0_11, %c0_12] : memref<16x96xf32, #tpu.memory_space<vmem>>, vector<16x96xf32>
      tpu.vector_store %arg6[%c0_11, %c0_12], %12 {strides = array<i32>} : memref<16x96xf32, #tpu.memory_space<vmem>>, vector<16x96xf32>,
    } else {
    }
    %c0 = arith.constant 0 : index
    %c0_1 = arith.constant 0 : index
    %3 = vector.load %arg6[%c0, %c0_1] : memref<16x96xf32, #tpu.memory_space<vmem>>, vector<16x96xf32>
    %c0_2 = arith.constant 0 : index
    %c0_3 = arith.constant 0 : index
    %4 = vector.load %arg3[%c0_2, %c0_3] : memref<16x32xbf16, #tpu.memory_space<vmem>>, vector<16x32xbf16>
    %c0_4 = arith.constant 0 : index
    %c0_5 = arith.constant 0 : index
    %5 = vector.load %arg4[%c0_4, %c0_5] : memref<32x96xbf16, #tpu.memory_space<vmem>>, vector<32x96xbf16>
    %cst = arith.constant dense<0.000000e+00> : vector<16x96xf32>
    %6 = tpu.matmul %4, %5, %cst {dimension_numbers = #tpu.dot_dimension_numbers<[1], [0], [0], [1], [0, 0, 1, 1], [], []>} : vector<16x32xbf16>, vector<32x96xbf16>, vector<16x96xf32> -> vector<16x96xf32>
    %7 = arith.addf %3, %6 : vector<16x96xf32>
    %c0_6 = arith.constant 0 : index
    %c0_7 = arith.constant 0 : index
    %8 = vector.load %arg6[%c0_6, %c0_7] : memref<16x96xf32, #tpu.memory_space<vmem>>, vector<16x96xf32>
    tpu.vector_store %arg6[%c0_6, %c0_7], %7 {strides = array<i32>} : memref<16x96xf32, #tpu.memory_space<vmem>>, vector<16x96xf32>,
    %c0_i32_8 = arith.constant 0 : i32
    %9 = arith.cmpi eq, %arg2, %c0_i32_8 : i32
    %10 = arith.extui %9 : i1 to i32
    %c0_i32_9 = arith.constant 0 : i32
    %11 = arith.cmpi ne, %10, %c0_i32_9 : i32
    scf.if %11 {
      %c0_10 = arith.constant 0 : index
      %c0_11 = arith.constant 0 : index
      %12 = vector.load %arg6[%c0_10, %c0_11] : memref<16x96xf32, #tpu.memory_space<vmem>>, vector<16x96xf32>
      %13 = arith.truncf %12 : vector<16x96xf32> to vector<16x96xbf16>
      %c0_12 = arith.constant 0 : index
      %c0_13 = arith.constant 0 : index
      %14 = vector.load %arg5[%c0_12, %c0_13] : memref<16x96xbf16, #tpu.memory_space<vmem>>, vector<16x96xbf16>
      tpu.vector_store %arg5[%c0_12, %c0_13], %13 {strides = array<i32>} : memref<16x96xbf16, #tpu.memory_space<vmem>>, vector<16x96xbf16>,
    } else {
    }
    return
  }
  func.func @transform_0(%arg0: i32, %arg1: i32, %arg2: i32) -> (i32, i32) {
    %c0_i32 = arith.constant 0 : i32
    return %arg0, %arg2 : i32, i32
  }
  func.func @transform_1(%arg0: i32, %arg1: i32, %arg2: i32) -> (i32, i32) {
    %c0_i32 = arith.constant 0 : i32
    return %arg2, %arg1 : i32, i32
  }
  func.func @transform_2(%arg0: i32, %arg1: i32, %arg2: i32) -> (i32, i32) {
    %c0_i32 = arith.constant 0 : i32
    return %arg0, %arg1 : i32, i32
  }
}

</mosaic_0001>

<llo_original>
// kernel: tpu_custom_call.1
$region0: #{tpu_custom_call.1}
  #allocation0 [shape = 'u32[]', space=smem, size = 0x4, offset = 0x4, fixed_abs, tag = 'smem constant byte address 0x4 - core index']
  #allocation1 [shape = 'u32[72,128]{1,0:T(1,128)}', space=vmem, size = 0x9000, scoped, tag = 'internal scratch']
  #allocation2 [shape = 'f32[16,96]{1,0:T(8,128)}', space=vmem, size = 0x2000, scoped, tag = 'scratch operand']
  %s0 = inlined_call_operand.hbm [shape: bf16[16,32], index: 0, kind: input, shape index: {}]
  %s1 = inlined_call_operand.hbm [shape: bf16[32,96], index: 1, kind: input, shape index: {}]
  %s2 = inlined_call_operand.hbm [shape: bf16[16,96], index: 2, kind: output, shape index: {}]
  %s3 = sld [smem:[#allocation0]]
  $region34: #{tpu_custom_call.1} parent=0
    _
  %s5 = ssub.s32 1, %s3
  %s6 = scalar_select 0, %s5, %s3
  $region1: #{tpu_custom_call.1} parent=0
    #allocation3 [shape = 'u8[4096]{0}', space=vmem, size = 0x1000, scoped, tag = 'input window, operand 0, single buffered']
    #allocation4 [shape = 's32[1]{0}', space=sflag, size = 0x4, scoped, tag = 'scoped memory for tpu_custom_call.1']
    #allocation5 [shape = 's32[1]{0}', space=sflag, size = 0x4, scoped, tag = 'scoped memory for tpu_custom_call.1']
    #allocation6 [shape = 'u8[8192]{0}', space=vmem, size = 0x2000, scoped, tag = 'input window, operand 1, single buffered']
    #allocation7 [shape = 's32[1]{0}', space=sflag, size = 0x4, scoped, tag = 'scoped memory for tpu_custom_call.1']
    #allocation8 [shape = 'u8[4096]{0}', space=vmem, size = 0x1000, scoped, tag = 'output window, operand 0, single buffered']
    %7 = vsyncpa [#allocation4], 0
    %8 = vsyncpa [#allocation7], 0
    %9 = vsyncpa [#allocation5], 0
    // Predicated region
    $region2: #{tpu_custom_call.1} parent=1 // pred_check
      _
    $region3: #{tpu_custom_call.1} parent=1 // pred_check_branch
      %11 = sbr.rel (0) target = $region5
    $region4: #{tpu_custom_call.1} parent=1 // pred_region
      %13 = vsyncadd [#allocation4], 0
      %s14 = sshll.u32 %s0, 4
      %s15 = int_to_ptr.hbm [resolvable:$true] %s14
      %s16 = sshll.u32 [#allocation3], 4
      %s17 = int_to_ptr.vmem [resolvable:$true] %s16
      %22 = dma.hbm_to_vmem [thread:$0]  %s15, 128, %s17, [#allocation4], 64, 64, 4
    $region5: #{tpu_custom_call.1} parent=1 // pred_fallthru
      _
    // Predicated region
    $region6: #{tpu_custom_call.1} parent=1 // pred_check
      _
    $region7: #{tpu_custom_call.1} parent=1 // pred_check_branch
      %24 = sbr.rel (0) target = $region9
    $region8: #{tpu_custom_call.1} parent=1 // pred_region
      %26 = vsyncadd [#allocation7], 0
      %s27 = sshll.u32 %s1, 4
      %s28 = int_to_ptr.hbm [resolvable:$true] %s27
      %s29 = sshll.u32 [#allocation6], 4
      %s30 = int_to_ptr.vmem [resolvable:$true] %s29
      %35 = dma.hbm_to_vmem [thread:$0]  %s28, 256, %s30, [#allocation7], 64, 64, 4
    $region9: #{tpu_custom_call.1} parent=1 // pred_fallthru
      _
    // Predicated region
    $region10: #{tpu_custom_call.1} parent=1 // pred_check
      _
    $region11: #{tpu_custom_call.1} parent=1 // pred_check_branch
      %37 = sbr.rel (0) target = $region13
    $region12: #{tpu_custom_call.1} parent=1 // pred_region
      %39 = dma.done [#allocation4], 128
    $region13: #{tpu_custom_call.1} parent=1 // pred_fallthru
      _
    // Predicated region
    $region14: #{tpu_custom_call.1} parent=1 // pred_check
      _
    $region15: #{tpu_custom_call.1} parent=1 // pred_check_branch
      %41 = sbr.rel (0) target = $region17
    $region16: #{tpu_custom_call.1} parent=1 // pred_region
      %43 = dma.done [#allocation7], 256
    $region17: #{tpu_custom_call.1} parent=1 // pred_fallthru
      _
    %p45 = scmp.eq.s32.totalorder 0, 0
    // Predicated region
    $region18: #{tpu_custom_call.1} parent=1 // pred_check
      %p46 = pneg %p45
    $region19: #{tpu_custom_call.1} parent=1 // pred_check_branch
      %48 = sbr.rel (%p46) target = $region21
    $region20: #{tpu_custom_call.1} parent=1 // pred_region
      %vm49 = vcmask 785408
      %50 = vst.msk [vmem:[#allocation2] sm:$0xff] %vm49, 0.0
      %51 = vst.msk [vmem:[#allocation2 + $0x8] sm:$0xff] %vm49, 0.0
    $region21: #{tpu_custom_call.1} parent=1 // pred_fallthru
      _
    %v52 = vld [vmem:[#allocation2] sm:$0xff]
    %v53 = vld [vmem:[#allocation2 + $0x8] sm:$0xff]
    %v54 = vld [vmem:[#allocation3] sm:$0xf]
    %v55 = vld [vmem:[#allocation3 + $0x4] sm:$0xf]
    %v56 = vld [vmem:[#allocation6] sm:$0xf]
    %v57 = vld [vmem:[#allocation6 + $0x4] sm:$0xf]
    %v58 = vld [vmem:[#allocation6 + $0x8] sm:$0xf]
    %v59 = vld [vmem:[#allocation6 + $0xc] sm:$0xf]
    %v62 = vunpack.c.l.b16 %v54
    %v63 = vunpack.c.l.b16 %v55
    %v64 = vpack.c.b16 %v63, %v62
    %v69 = vunpack.c.l.b16 %v56
    %v70 = vunpack.c.l.b16 %v57
    %v71 = vunpack.c.l.b16 %v58
    %v72 = vunpack.c.l.b16 %v59
    %v73 = vpack.c.b16 %v70, %v69
    %v74 = vpack.c.b16 %v72, %v71
    %vm77 = vcmask 261120
    %v79 = vsel %vm77, %v64, 0
    %81 = vmatpush.bf16.msra.mxu0 0
    %82 = vmatpush.bf16.msra.mxu0 0
    %83 = vmatpush.bf16.msra.mxu0 0
    %84 = vmatpush.bf16.msra.mxu0 0
    %85 = vmatpush.bf16.msra.mxu0 0
    %86 = vmatpush.bf16.msra.mxu0 0
    %87 = vmatpush.bf16.msra.mxu0 %v74
    %88 = vmatpush.bf16.msra.mxu0 %v73
    %89 = vmatmul.bf16.gmra.mxu0 %v79
    %v90 = vpop.f32.mrf.mxu0
    %v91 = vadd.f32 0.0, %v90
    %v92 = vpop.f32.mrf.mxu0
    %v93 = vadd.f32 0.0, %v92
    %94 = vdwg.mxu0
    %v95 = vadd.f32 %v52, %v91
    %v96 = vadd.f32 %v53, %v93
    %vm97 = vcmask 785408
    %98 = vst.msk [vmem:[#allocation2] sm:$0xff] %vm97, %v95
    %99 = vst.msk [vmem:[#allocation2 + $0x8] sm:$0xff] %vm97, %v96
    // Predicated region
    $region22: #{tpu_custom_call.1} parent=1 // pred_check
      %p100 = pneg %p45
    $region23: #{tpu_custom_call.1} parent=1 // pred_check_branch
      %102 = sbr.rel (%p100) target = $region25
    $region24: #{tpu_custom_call.1} parent=1 // pred_region
      %v103 = vld [vmem:[#allocation2] sm:$0xff]
      %v104 = vld [vmem:[#allocation2 + $0x8] sm:$0xff]
      %v105 = vpack.c.bf16 %v103, %v103
      %v106 = vpack.c.bf16 %v104, %v104
      %vm107 = vcmask 781312
      %108 = vst.msk [vmem:[#allocation8] sm:$0xf] %vm107, %v105
      %109 = vst.msk [vmem:[#allocation8 + $0x4] sm:$0xf] %vm107, %v106
    $region25: #{tpu_custom_call.1} parent=1 // pred_fallthru
      _
    // Predicated region
    $region26: #{tpu_custom_call.1} parent=1 // pred_check
      _
    $region27: #{tpu_custom_call.1} parent=1 // pred_check_branch
      %111 = sbr.rel (0) target = $region29
    $region28: #{tpu_custom_call.1} parent=1 // pred_region
      %113 = vsyncadd [#allocation5], 0
      %s114 = sshll.u32 [#allocation8], 4
      %s115 = int_to_ptr.vmem [resolvable:$true] %s114
      %s116 = sshll.u32 %s2, 4
      %s117 = int_to_ptr.hbm [resolvable:$true] %s116
      %122 = dma.vmem_to_hbm [thread:$0]  %s115, 128, %s117, [#allocation5], 64, 64, 4
    $region29: #{tpu_custom_call.1} parent=1 // pred_fallthru
      _
    // Predicated region
    $region30: #{tpu_custom_call.1} parent=1 // pred_check
      _
    $region31: #{tpu_custom_call.1} parent=1 // pred_check_branch
      %124 = sbr.rel (0) target = $region33
    $region32: #{tpu_custom_call.1} parent=1 // pred_region
      %126 = dma.done [#allocation5], 128
    $region33: #{tpu_custom_call.1} parent=1 // pred_fallthru
      _
    %127 = vsyncpa [#allocation4], 1
    %128 = vsyncpa [#allocation7], 1
    %129 = vsyncpa [#allocation5], 1

</llo_original>
